<compile_context>
chip_gen: v6e
topology: v6e:2x2x1
jax: 0.10.0
libtpu: 0.0.40
codegen_flags: <defaults>
</compile_context>

<pallas_src>
import numpy as np
from numpy import sin, cos, tan, pi, arcsin, arctan
from functools import lru_cache
from math import gcd
from types import SimpleNamespace

import jax
import jax.numpy as jnp
from jax.experimental import pallas as pl
from jax.experimental.pallas import tpu as pltpu

np.seterr(all="ignore")  # cal_index has benign div-by-zero near poles (same as reference)


# ----------------------------------------------------------------------------
# Host-side coordinate generation (verbatim numpy port of the PyTorch helpers).
# ----------------------------------------------------------------------------
@lru_cache(None)
def get_xy(delta_phi, delta_theta):
    return np.array([
        [(-tan(delta_theta), 1 / cos(delta_theta) * tan(delta_phi)),
         (0, tan(delta_phi)),
         (tan(delta_theta), 1 / cos(delta_theta) * tan(delta_phi))],
        [(-tan(delta_theta), 0), (1, 1), (tan(delta_theta), 0)],
        [(-tan(delta_theta), -1 / cos(delta_theta) * tan(delta_phi)),
         (0, -tan(delta_phi)),
         (tan(delta_theta), -1 / cos(delta_theta) * tan(delta_phi))],
    ])


@lru_cache(None)
def cal_index(h, w, img_r, img_c):
    phi = -((img_r + 0.5) / h * pi - pi / 2)
    theta = (img_c + 0.5) / w * 2 * pi - pi
    delta_phi = pi / h
    delta_theta = 2 * pi / w
    xys = get_xy(delta_phi, delta_theta)
    x = xys[..., 0]
    y = xys[..., 1]
    rho = np.sqrt(x ** 2 + y ** 2)
    v = arctan(rho)
    new_phi = arcsin(cos(v) * sin(phi) + y * sin(v) * cos(phi) / rho)
    new_theta = theta + arctan(
        x * sin(v) / (rho * cos(phi) * cos(v) - y * sin(phi) * sin(v)))
    new_r = (-new_phi + pi / 2) * h / pi - 0.5
    new_c = (new_theta + pi) * w / (2 * pi) - 0.5
    new_c = (new_c + w) % w
    new_result = np.stack([new_r, new_c], axis=-1)
    new_result[1, 1] = (img_r, img_c)
    return new_result


@lru_cache(None)
def _gen_filters_coordinates(h, w, stride):
    co = np.array([[cal_index(h, w, i, j) for j in range(0, w, stride)]
                   for i in range(0, h, stride)])
    return np.ascontiguousarray(co.transpose([4, 0, 1, 2, 3]))


def gen_filters_coordinates(h, w, stride=1):
    h = int(h)
    w = int(w)
    return _gen_filters_coordinates(h, w, stride).copy()


def gen_grid_coordinates(h, w, stride=1):
    h = int(h)
    w = int(w)
    coordinates = gen_filters_coordinates(h, w, stride).copy()
    coordinates[0] = coordinates[0] * 2 / h - 1
    coordinates[1] = coordinates[1] * 2 / w - 1
    coordinates = coordinates[::-1]
    coordinates = coordinates.transpose(1, 3, 2, 4, 0)
    sz = coordinates.shape
    coordinates = coordinates.reshape(1, sz[0] * sz[1], sz[2] * sz[3], sz[4])
    return coordinates.copy()


# ----------------------------------------------------------------------------
# Small helpers: alignment + VMEM budget.
# ----------------------------------------------------------------------------
def _ceil_to(x, m):
    return -(-int(x) // int(m)) * int(m)


def _vmem_capacity_bytes():
    """Physical VMEM per TensorCore; conservative 64 MiB (v7x) if the query fails."""
    try:
        cap = int(getattr(pltpu.get_tpu_info(), "vmem_capacity_bytes", 0))
        if cap >= 32 * 1024 * 1024:
            return cap
    except Exception:
        pass
    return 64 * 1024 * 1024


def _vmem_limit_bytes():
    # ~75% of physical VMEM: 48 MiB on a 64-MiB part (v7x-safe, leaves Mosaic
    # internal scratch), ~96 MiB on 128-MiB parts (v5e/v6e).
    return min((_vmem_capacity_bytes() * 3) // 4, 112 * 1024 * 1024)


def _pick_tm(M, TK, TN, itemsize):
    """Largest M tile fitting ~half of VMEM (double-buffered); multiple of 16."""
    budget = _vmem_capacity_bytes() // 2
    m16 = _ceil_to(max(M, 1), 16)
    fixed = 2 * TK * TN * itemsize                 # S, double-buffered
    per_tm = 2 * TK * itemsize + 12 * TN           # x (dbl-buf) + out (dbl-buf f32) + acc f32
    avail = max(budget - fixed, per_tm * 16)
    tm_cap = max(16, (avail // per_tm) // 16 * 16)
    tm_cap = min(tm_cap, 2048)
    if m16 <= tm_cap:
        return m16, m16
    tm = (tm_cap // 256) * 256 if tm_cap >= 256 else tm_cap
    return tm, _ceil_to(M, tm)


# ----------------------------------------------------------------------------
# Plan: bilinear sampling matrices, row-aligned layouts, per-tile band table.
# Cached per (H, W, stride, compute_dtype) -> built and uploaded once.
# ----------------------------------------------------------------------------
@lru_cache(None)
def _get_plan(H, W, stride, compute_dtype):
    # --- bilinear corners of grid_sample(align_corners=False, 'zeros') -------
    coords = gen_grid_coordinates(H, W, stride)[0]        # (3*Hp, 3*Wp, 2) = (x, y)
    Hp = coords.shape[0] // 3
    Wp = coords.shape[1] // 3
    g = coords.reshape(Hp, 3, Wp, 3, 2)                   # (ii, ky, jj, kx, (x, y))
    gx, gy = g[..., 0], g[..., 1]
    ix = ((gx + 1.0) * W - 1.0) / 2.0
    iy = ((gy + 1.0) * H - 1.0) / 2.0
    x0 = np.floor(ix).astype(np.int64); x1 = x0 + 1
    y0 = np.floor(iy).astype(np.int64); y1 = y0 + 1
    wx1 = ix - x0; wx0 = 1.0 - wx1
    wy1 = iy - y0; wy0 = 1.0 - wy1

    # --- row-aligned layouts --------------------------------------------------
    W_row = W if (W % 16 == 0 or 128 % W == 0) else _ceil_to(W, 16)
    Wp_row = Wp if (Wp % 16 == 0 or 128 % Wp == 0) else _ceil_to(Wp, 16)

    g_out = 128 // gcd(Wp_row, 128)          # output rows per N tile (lane aligned)
    TN = g_out * Wp_row                      # multiple of 128
    Hp_pad = _ceil_to(Hp, g_out)
    N_pad = Hp_pad * Wp_row
    Jt = N_pad // TN                         # == Hp_pad // g_out

    # --- per-output-row source-row bands (union over taps & bilinear corners) -
    row_lo = np.clip(y0, 0, H - 1).min(axis=(1, 2, 3))    # (Hp,)
    row_hi = np.clip(y1, 0, H - 1).max(axis=(1, 2, 3))    # (Hp,)
    tile_lo = np.empty(Jt, np.int64)
    tile_hi = np.empty(Jt, np.int64)
    for jt in range(Jt):
        r0 = jt * g_out
        r1 = min((jt + 1) * g_out, Hp) - 1
        tile_lo[jt] = row_lo[r0:r1 + 1].min()
        tile_hi[jt] = row_hi[r0:r1 + 1].max()

    # --- row-aligned K blocks sized to (mostly) cover the per-tile band -------
    rk0 = 128 // gcd(W_row, 128)             # minimal source rows per K block
    band_rows = int((tile_hi - tile_lo).max()) + 1
    g_k = min(_ceil_to(band_rows, rk0), _ceil_to(H, rk0))
    MAX_TK = 8192                            # keep x/S tiles VMEM-friendly
    if g_k * W_row > MAX_TK:
        g_k = max(rk0, (MAX_TK // W_row) // rk0 * rk0)
    TK = g_k * W_row                         # multiple of 128
    H_pad = _ceil_to(H, g_k)
    K_pad = H_pad * W_row                    # multiple of TK

    kb_start = (tile_lo // g_k).astype(np.int32)                      # (Jt,)
    kb_len = (tile_hi // g_k - tile_lo // g_k + 1).astype(np.int32)   # (Jt,)
    NKB = int(kb_len.max())

    # --- dense per-tap sampling matrices (zero outside each tap's support) ----
    # TODO(synk): replace the dense S by a band-compressed / gather+FMA layout
    # for large H*W (dense S is O((H*W)^2) host memory).
    S = np.zeros((9, K_pad, N_pad), dtype=np.float32)
    ii, ky, jj, kx = np.meshgrid(np.arange(Hp), np.arange(3),
                                 np.arange(Wp), np.arange(3), indexing="ij")
    kidx = (ky * 3 + kx).ravel()
    dst = (ii * Wp_row + jj).ravel()
    for yy, xx, ww in [(y0, x0, wy0 * wx0), (y0, x1, wy0 * wx1),
                       (y1, x0, wy1 * wx0), (y1, x1, wy1 * wx1)]:
        valid = (xx >= 0) & (xx < W) & (yy >= 0) & (yy < H)
        src = (np.clip(yy, 0, H - 1) * W_row + np.clip(xx, 0, W - 1)).ravel()
        w = (ww * valid).astype(np.float32).ravel()
        np.add.at(S, (kidx, src, dst), w)

    return SimpleNamespace(
        S=jnp.asarray(S, dtype=compute_dtype),             # streamed low precision
        kb_start=jnp.asarray(kb_start),                    # SMEM scalar prefetch
        kb_len=jnp.asarray(kb_len),
        Hp=Hp, Wp=Wp, W_row=W_row, Wp_row=Wp_row,
        Hp_pad=Hp_pad, H_pad=H_pad, K_pad=K_pad, N_pad=N_pad,
        TN=TN, TK=TK, Jt=Jt, NKB=NKB)


# ----------------------------------------------------------------------------
# Pallas kernel.
# grid = (i: M tiles, j: output row-tiles, k: 9 spherical taps, kb: band blocks)
# The output block (resident across k and kb) keeps the running max over taps;
# acc_ref carries the banded-matmul partial when a band spans >1 K block.
# ----------------------------------------------------------------------------
def _sphere_maxpool_kernel(kb_start_ref, kb_len_ref, x_ref, s_ref, o_ref, acc_ref):
    del kb_start_ref                       # consumed only by the index_maps
    j = pl.program_id(1)
    k = pl.program_id(2)                   # spherical tap 0..8
    kb = pl.program_id(3)                  # K block within this tile's band
    blen = kb_len_ref[j]

    @pl.when(kb < blen)                    # padded band tail: no DMA (clamped idx), no work
    def _():
        part = jnp.dot(x_ref[...], s_ref[...], preferred_element_type=jnp.float32)
        is_last = kb == blen - 1

        def _emit(total):
            @pl.when(is_last & (k == 0))
            def _():                       # first tap initializes the running max
                o_ref[...] = total

            @pl.when(is_last & (k > 0))
            def _():                       # running max over taps == MaxPool2d(3, 3)
                o_ref[...] = jnp.maximum(o_ref[...], total)

            @pl.when(jnp.logical_not(is_last))
            def _():                       # stash partial for the next band block
                acc_ref[...] = total

        @pl.when(kb == 0)
        def _():
            _emit(part)

        @pl.when(kb > 0)
        def _():
            _emit(acc_ref[...] + part)


def sphere_max_pool2d(x, stride=1, compute_dtype=jnp.bfloat16):
    """x: (N, C, H, W) array (NCHW, same layout as the PyTorch module)."""
    N, C, H, W = x.shape
    plan = _get_plan(int(H), int(W), int(stride), compute_dtype)
    M = N * C
    itemsize = np.dtype(compute_dtype).itemsize
    TM, M_pad = _pick_tm(M, plan.TK, plan.TN, itemsize)
    TK, TN = plan.TK, plan.TN

    # Source image: pad rows to W_row (row-aligned K layout) and to H_pad rows,
    # flatten to (M_pad, K_pad) for the banded contraction.
    x_img = x.reshape(M, H, W).astype(compute_dtype)
    if plan.H_pad != H or plan.W_row != W:
        x_img = jnp.pad(x_img, ((0, 0), (0, plan.H_pad - H), (0, plan.W_row - W)))
    x_flat = x_img.reshape(M, plan.K_pad)
    if M_pad != M:
        x_flat = jnp.pad(x_flat, ((0, M_pad - M), (0, 0)))

    grid = (M_pad // TM, plan.Jt, 9, plan.NKB)

    out_flat = pl.pallas_call(
        _sphere_maxpool_kernel,
        out_shape=jax.ShapeDtypeStruct((M_pad, plan.N_pad), jnp.float32),
        grid_spec=pltpu.PrefetchScalarGridSpec(
            num_scalar_prefetch=2,                          # kb_start, kb_len -> SMEM
            grid=grid,
            in_specs=[
                # x: only the contributing row band is streamed.  The block index
                # is shared by all 9 taps of a tile and clamped on padded band
                # tails, so Pallas re-uses the DMA'd block across grid steps.
                pl.BlockSpec(
                    (TM, TK),
                    lambda i, j, k, kb, kbs, kbl:
                        (i, kbs[j] + jnp.minimum(kb, kbl[j] - 1))),
                # S: tap dim squeezed; same banded K block; lane-dense, row-aligned
                # output tile.
                pl.BlockSpec(
                    (pl.Squeezed(), TK, TN),
                    lambda i, j, k, kb, kbs, kbl:
                        (k, kbs[j] + jnp.minimum(kb, kbl[j] - 1), j)),
            ],
            out_specs=pl.BlockSpec((TM, TN), lambda i, j, k, kb, kbs, kbl: (i, j)),
            scratch_shapes=[pltpu.VMEM((TM, TN), jnp.float32)],
        ),
        compiler_params=pltpu.CompilerParams(
            dimension_semantics=("parallel", "parallel", "arbitrary", "arbitrary"),
            vmem_limit_bytes=_vmem_limit_bytes(),
        ),
    )(plan.kb_start, plan.kb_len, x_flat, plan.S)

    out = out_flat[:M].reshape(M, plan.Hp_pad, plan.Wp_row)[:, :plan.Hp, :plan.Wp]
    return out.reshape(N, C, plan.Hp, plan.Wp).astype(x.dtype)


# ----------------------------------------------------------------------------
# Pure-numpy reference (mirrors torch grid_sample + MaxPool2d(3, 3)).
# ----------------------------------------------------------------------------
def _reference(x_np, stride=1):
    N, C, H, W = x_np.shape
    coords = gen_grid_coordinates(H, W, stride)[0]
    gx = coords[..., 0]; gy = coords[..., 1]
    ix = ((gx + 1.0) * W - 1.0) / 2.0
    iy = ((gy + 1.0) * H - 1.0) / 2.0
    x0 = np.floor(ix).astype(int); x1 = x0 + 1
    y0 = np.floor(iy).astype(int); y1 = y0 + 1
    wx1 = ix - x0; wx0 = 1.0 - wx1
    wy1 = iy - y0; wy0 = 1.0 - wy1

    def gather(yy, xx):
        valid = (xx >= 0) & (xx < W) & (yy >= 0) & (yy < H)
        v = x_np[:, :, np.clip(yy, 0, H - 1), np.clip(xx, 0, W - 1)]
        return v * valid

    samp = (gather(y0, x0) * (wy0 * wx0) + gather(y0, x1) * (wy0 * wx1)
            + gather(y1, x0) * (wy1 * wx0) + gather(y1, x1) * (wy1 * wx1))
    Hg, Wg = samp.shape[2], samp.shape[3]
    Hp, Wp = Hg // 3, Wg // 3
    samp = samp.reshape(N, C, Hp, 3, Wp, 3)
    return samp.max(axis=(3, 5))


if __name__ == "__main__":
    key = jax.random.PRNGKey(0)
    N, C, H, W = 2, 4, 16, 16
    x = jax.random.normal(key, (N, C, H, W), dtype=jnp.float32)

    out = sphere_max_pool2d(x, stride=1)
    out = jax.block_until_ready(out)

    ref = _reference(np.asarray(x).astype(np.float64), stride=1)
    assert out.shape == ref.shape, (out.shape, ref.shape)
    err = float(np.max(np.abs(np.asarray(out) - ref)))
    assert np.allclose(np.asarray(out), ref, rtol=5e-2, atol=5e-2), err

    print("KERNEL_OK")
</pallas_src>

<mosaic_0001>
module attributes {stable_mosaic.version = 11 : i64} {
  func.func @_sphere_maxpool_kernel(%arg0: i32, %arg1: i32, %arg2: i32, %arg3: i32, %arg4: memref<2xi32, #tpu.memory_space<smem>>, %arg5: memref<2xi32, #tpu.memory_space<smem>>, %arg6: memref<16x256xbf16, #tpu.memory_space<vmem>>, %arg7: memref<1x256x128xbf16, #tpu.memory_space<vmem>>, %arg8: memref<16x128xf32, #tpu.memory_space<vmem>>, %arg9: memref<16x128xf32, #tpu.memory_space<vmem>>) attributes {dimension_semantics = [#tpu.dimension_semantics<parallel>, #tpu.dimension_semantics<parallel>, #tpu.dimension_semantics<arbitrary>, #tpu.dimension_semantics<arbitrary>], iteration_bounds = array<i64: 1, 2, 9, 1>, scalar_prefetch = 2 : i64, scratch_operands = 1 : i64, tpu.core_type = #tpu.core_type<tc>, window_params = [{transform_indices = @transform_0, window_bounds = array<i64: 16, 256>}, {transform_indices = @transform_1, window_bounds = array<i64: 1, 256, 128>}, {transform_indices = @transform_2, window_bounds = array<i64: 16, 128>}]} {
    %0 = arith.index_cast %arg1 : i32 to index
    %1 = memref.load %arg5[%0] : memref<2xi32, #tpu.memory_space<smem>>
    %2 = arith.cmpi slt, %arg3, %1 : i32
    %3 = arith.extui %2 : i1 to i32
    %c0_i32 = arith.constant 0 : i32
    %4 = arith.cmpi ne, %3, %c0_i32 : i32
    scf.if %4 {
      %c0 = arith.constant 0 : index
      %c0_0 = arith.constant 0 : index
      %5 = vector.load %arg6[%c0, %c0_0] : memref<16x256xbf16, #tpu.memory_space<vmem>>, vector<16x256xbf16>
      %c0_1 = arith.constant 0 : index
      %c0_2 = arith.constant 0 : index
      %c0_3 = arith.constant 0 : index
      %6 = vector.load %arg7[%c0_1, %c0_2, %c0_3] : memref<1x256x128xbf16, #tpu.memory_space<vmem>>, vector<1x256x128xbf16>
      %7 = vector.shape_cast %6 : vector<1x256x128xbf16> to vector<256x128xbf16>
      %cst = arith.constant dense<0.000000e+00> : vector<16x128xf32>
      %8 = tpu.matmul %5, %7, %cst {dimension_numbers = #tpu.dot_dimension_numbers<[1], [0], [0], [1], [0, 0, 1, 1], [], []>} : vector<16x256xbf16>, vector<256x128xbf16>, vector<16x128xf32> -> vector<16x128xf32>
      %c1_i32 = arith.constant 1 : i32
      %9 = arith.subi %1, %c1_i32 : i32
      %10 = arith.cmpi eq, %arg3, %9 : i32
      %c0_i32_4 = arith.constant 0 : i32
      %11 = arith.cmpi eq, %arg3, %c0_i32_4 : i32
      %12 = arith.extui %11 : i1 to i32
      %c0_i32_5 = arith.constant 0 : i32
      %13 = arith.cmpi ne, %12, %c0_i32_5 : i32
      scf.if %13 {
        %c0_i32_8 = arith.constant 0 : i32
        %17 = arith.cmpi eq, %arg2, %c0_i32_8 : i32
        %18 = arith.andi %10, %17 : i1
        %19 = arith.extui %18 : i1 to i32
        %c0_i32_9 = arith.constant 0 : i32
        %20 = arith.cmpi ne, %19, %c0_i32_9 : i32
        scf.if %20 {
          %c0_13 = arith.constant 0 : index
          %c0_14 = arith.constant 0 : index
          %28 = vector.load %arg8[%c0_13, %c0_14] : memref<16x128xf32, #tpu.memory_space<vmem>>, vector<16x128xf32>
          tpu.vector_store %arg8[%c0_13, %c0_14], %8 {strides = array<i32>} : memref<16x128xf32, #tpu.memory_space<vmem>>, vector<16x128xf32>,
        } else {
        }
        %c0_i32_10 = arith.constant 0 : i32
        %21 = arith.cmpi sgt, %arg2, %c0_i32_10 : i32
        %22 = arith.andi %10, %21 : i1
        %23 = arith.extui %22 : i1 to i32
        %c0_i32_11 = arith.constant 0 : i32
        %24 = arith.cmpi ne, %23, %c0_i32_11 : i32
        scf.if %24 {
          %c0_13 = arith.constant 0 : index
          %c0_14 = arith.constant 0 : index
          %28 = vector.load %arg8[%c0_13, %c0_14] : memref<16x128xf32, #tpu.memory_space<vmem>>, vector<16x128xf32>
          %29 = arith.maximumf %28, %8 : vector<16x128xf32>
          %c0_15 = arith.constant 0 : index
          %c0_16 = arith.constant 0 : index
          %30 = vector.load %arg8[%c0_15, %c0_16] : memref<16x128xf32, #tpu.memory_space<vmem>>, vector<16x128xf32>
          tpu.vector_store %arg8[%c0_15, %c0_16], %29 {strides = array<i32>} : memref<16x128xf32, #tpu.memory_space<vmem>>, vector<16x128xf32>,
        } else {
        }
        %true = arith.constant true
        %25 = arith.xori %10, %true : i1
        %26 = arith.extui %25 : i1 to i32
        %c0_i32_12 = arith.constant 0 : i32
        %27 = arith.cmpi ne, %26, %c0_i32_12 : i32
        scf.if %27 {
          %c0_13 = arith.constant 0 : index
          %c0_14 = arith.constant 0 : index
          %28 = vector.load %arg9[%c0_13, %c0_14] : memref<16x128xf32, #tpu.memory_space<vmem>>, vector<16x128xf32>
          tpu.vector_store %arg9[%c0_13, %c0_14], %8 {strides = array<i32>} : memref<16x128xf32, #tpu.memory_space<vmem>>, vector<16x128xf32>,
        } else {
        }
      } else {
      }
      %c0_i32_6 = arith.constant 0 : i32
      %14 = arith.cmpi sgt, %arg3, %c0_i32_6 : i32
      %15 = arith.extui %14 : i1 to i32
      %c0_i32_7 = arith.constant 0 : i32
      %16 = arith.cmpi ne, %15, %c0_i32_7 : i32
      scf.if %16 {
        %c0_8 = arith.constant 0 : index
        %c0_9 = arith.constant 0 : index
        %17 = vector.load %arg9[%c0_8, %c0_9] : memref<16x128xf32, #tpu.memory_space<vmem>>, vector<16x128xf32>
        %18 = arith.addf %17, %8 : vector<16x128xf32>
        %c0_i32_10 = arith.constant 0 : i32
        %19 = arith.cmpi eq, %arg2, %c0_i32_10 : i32
        %20 = arith.andi %10, %19 : i1
        %21 = arith.extui %20 : i1 to i32
        %c0_i32_11 = arith.constant 0 : i32
        %22 = arith.cmpi ne, %21, %c0_i32_11 : i32
        scf.if %22 {
          %c0_15 = arith.constant 0 : index
          %c0_16 = arith.constant 0 : index
          %30 = vector.load %arg8[%c0_15, %c0_16] : memref<16x128xf32, #tpu.memory_space<vmem>>, vector<16x128xf32>
          tpu.vector_store %arg8[%c0_15, %c0_16], %18 {strides = array<i32>} : memref<16x128xf32, #tpu.memory_space<vmem>>, vector<16x128xf32>,
        } else {
        }
        %c0_i32_12 = arith.constant 0 : i32
        %23 = arith.cmpi sgt, %arg2, %c0_i32_12 : i32
        %24 = arith.andi %10, %23 : i1
        %25 = arith.extui %24 : i1 to i32
        %c0_i32_13 = arith.constant 0 : i32
        %26 = arith.cmpi ne, %25, %c0_i32_13 : i32
        scf.if %26 {
          %c0_15 = arith.constant 0 : index
          %c0_16 = arith.constant 0 : index
          %30 = vector.load %arg8[%c0_15, %c0_16] : memref<16x128xf32, #tpu.memory_space<vmem>>, vector<16x128xf32>
          %31 = arith.maximumf %30, %18 : vector<16x128xf32>
          %c0_17 = arith.constant 0 : index
          %c0_18 = arith.constant 0 : index
          %32 = vector.load %arg8[%c0_17, %c0_18] : memref<16x128xf32, #tpu.memory_space<vmem>>, vector<16x128xf32>
          tpu.vector_store %arg8[%c0_17, %c0_18], %31 {strides = array<i32>} : memref<16x128xf32, #tpu.memory_space<vmem>>, vector<16x128xf32>,
        } else {
        }
        %true = arith.constant true
        %27 = arith.xori %10, %true : i1
        %28 = arith.extui %27 : i1 to i32
        %c0_i32_14 = arith.constant 0 : i32
        %29 = arith.cmpi ne, %28, %c0_i32_14 : i32
        scf.if %29 {
          %c0_15 = arith.constant 0 : index
          %c0_16 = arith.constant 0 : index
          %30 = vector.load %arg9[%c0_15, %c0_16] : memref<16x128xf32, #tpu.memory_space<vmem>>, vector<16x128xf32>
          tpu.vector_store %arg9[%c0_15, %c0_16], %18 {strides = array<i32>} : memref<16x128xf32, #tpu.memory_space<vmem>>, vector<16x128xf32>,
        } else {
        }
      } else {
      }
    } else {
    }
    return
  }
  func.func @transform_0(%arg0: i32, %arg1: i32, %arg2: i32, %arg3: i32, %arg4: memref<2xi32, #tpu.memory_space<smem>>, %arg5: memref<2xi32, #tpu.memory_space<smem>>) -> (i32, i32) {
    %0 = arith.index_cast %arg1 : i32 to index
    %1 = memref.load %arg4[%0] : memref<2xi32, #tpu.memory_space<smem>>
    %2 = arith.index_cast %arg1 : i32 to index
    %3 = memref.load %arg5[%2] : memref<2xi32, #tpu.memory_space<smem>>
    %c1_i32 = arith.constant 1 : i32
    %4 = arith.subi %3, %c1_i32 : i32
    %5 = arith.minsi %arg3, %4 : i32
    %6 = arith.addi %1, %5 : i32
    %c0_i32 = arith.constant 0 : i32
    return %arg0, %6 : i32, i32
  }
  func.func @transform_1(%arg0: i32, %arg1: i32, %arg2: i32, %arg3: i32, %arg4: memref<2xi32, #tpu.memory_space<smem>>, %arg5: memref<2xi32, #tpu.memory_space<smem>>) -> (i32, i32, i32) {
    %0 = arith.index_cast %arg1 : i32 to index
    %1 = memref.load %arg4[%0] : memref<2xi32, #tpu.memory_space<smem>>
    %2 = arith.index_cast %arg1 : i32 to index
    %3 = memref.load %arg5[%2] : memref<2xi32, #tpu.memory_space<smem>>
    %c1_i32 = arith.constant 1 : i32
    %4 = arith.subi %3, %c1_i32 : i32
    %5 = arith.minsi %arg3, %4 : i32
    %6 = arith.addi %1, %5 : i32
    %c0_i32 = arith.constant 0 : i32
    return %arg2, %6, %arg1 : i32, i32, i32
  }
  func.func @transform_2(%arg0: i32, %arg1: i32, %arg2: i32, %arg3: i32, %arg4: memref<2xi32, #tpu.memory_space<smem>>, %arg5: memref<2xi32, #tpu.memory_space<smem>>) -> (i32, i32) {
    %c0_i32 = arith.constant 0 : i32
    return %arg0, %arg1 : i32, i32
  }
}

</mosaic_0001>

<llo_original>
// kernel: tpu_custom_call.1
$region0: #{tpu_custom_call.1}
  #allocation0 [shape = 'u32[]', space=smem, size = 0x4, offset = 0x4, fixed_abs, tag = 'smem constant byte address 0x4 - core index']
  #allocation1 [shape = 'u32[144,128]{1,0:T(1,128)}', space=vmem, size = 0x12000, scoped, tag = 'internal scratch']
  #allocation2 [shape = 'f32[16,128]{1,0:T(8,128)}', space=vmem, size = 0x2000, scoped, tag = 'scratch operand']
  #allocation3 [shape = 's32[1]{0}', space=sflag, size = 0x4, scoped, tag = 'scoped memory for tpu_custom_call.1']
  #allocation4 [shape = 'u8[512]{0}', space=smem, size = 0x200, scoped, tag = 'prefetched SMEM operand 0']
  #allocation5 [shape = 'u8[512]{0}', space=smem, size = 0x200, scoped, tag = 'prefetched SMEM operand 1']
  %s0 = inlined_call_operand.hbm [shape: s32[2], index: 0, kind: input, shape index: {}]
  %s1 = inlined_call_operand.hbm [shape: s32[2], index: 1, kind: input, shape index: {}]
  %s2 = inlined_call_operand.hbm [shape: bf16[16,256], index: 2, kind: input, shape index: {}]
  %s3 = inlined_call_operand.hbm [shape: bf16[9,256,256], index: 3, kind: input, shape index: {}]
  %s4 = inlined_call_operand.hbm [shape: f32[16,256], index: 4, kind: output, shape index: {}]
  %s5 = sld [smem:[#allocation0]]
  $region85: #{tpu_custom_call.1} parent=0
    _
  %s7 = ssub.s32 1, %s5
  %s8 = scalar_select 0, %s7, %s5
  %10 = dma.hbm_to_smem %s0, 16, [#allocation4], [#allocation3]
  %12 = dma.hbm_to_smem %s1, 16, [#allocation5], [#allocation3]
  %13 = dma.done [#allocation3], 32
  %14 = sfence
  $region1: #{tpu_custom_call.1} parent=0
    #allocation6 [shape = 'u8[16384]{0}', space=vmem, size = 0x4000, scoped, tag = 'input window, operand 2']
    #allocation7 [shape = 's32[2]{0}', space=sflag, size = 0x8, scoped, tag = 'scoped memory for tpu_custom_call.1']
    #allocation8 [shape = 's32[2]{0}', space=sflag, size = 0x8, scoped, tag = 'scoped memory for tpu_custom_call.1']
    #allocation9 [shape = 'u8[131072]{0}', space=vmem, size = 0x20000, scoped, tag = 'input window, operand 3']
    #allocation10 [shape = 's32[2]{0}', space=sflag, size = 0x8, scoped, tag = 'scoped memory for tpu_custom_call.1']
    #allocation11 [shape = 'u8[16384]{0}', space=vmem, size = 0x4000, scoped, tag = 'output window, operand 0']
    %15 = vsyncpa [#allocation7], 0
    %s16 = scalar_lea.sflag [#allocation7], 1
    %17 = vsyncpa %s16, 0
    %18 = vsyncpa [#allocation10], 0
    %s19 = scalar_lea.sflag [#allocation10], 1
    %20 = vsyncpa %s19, 0
    %21 = vsyncpa [#allocation8], 0
    %s22 = scalar_lea.sflag [#allocation8], 1
    %23 = vsyncpa %s22, 0
    loop: start=0, step=1, limit=20
    $region2: #{tpu_custom_call.1} parent=1 // loop_pre_header
      _
    $region3: #{tpu_custom_call.1} parent=1 // loop_header
      %s25 = sphi 0, %s29
      %p26 = scmp.ge.s32.totalorder %s25, 20
      %s32 = sphi 0, %s58
      %s33 = sphi 0, %s54
      %s34 = sphi 0, %s50
      %s35 = sphi 0, %s46
      %s36 = sphi 0, %s32
      %s37 = sphi 0, %s33
      %s38 = sphi 0, %s34
      %s39 = sphi 0, %s35
      %s40 = sphi 0, %s36
      %s41 = sphi 0, %s37
      %s42 = sphi 0, %s38
      %s43 = sphi 0, %s39
      %s75 = sphi 0, %s77
      %s78 = sphi 0, %s75
      %s79 = sphi 0, %s78
      %s95 = sphi 0, %s79
      %s117 = sphi 0, %s119
      %s120 = sphi 0, %s117
      %s121 = sphi 0, %s120
      %s137 = sphi 0, %s121
      %s145 = sphi 0, %s147
      %s148 = sphi 0, %s145
      %s149 = sphi 0, %s148
      %s165 = sphi 0, %s149
    $region4: #{tpu_custom_call.1} parent=1 // loop_header_branch
      %28 = sbr.rel (%p26) target = $region8
    $region5: #{tpu_custom_call.1} parent=1 // loop_body
      %s30 = ssub.s32 %s25, 1
      %s31 = ssub.s32 %s25, 2
      %s44 = sadd.s32 1, %s35
      %p45 = scmp.ge.s32.totalorder %s44, 1
      %s46 = scalar_select %p45, 0, %s44
      %s47 = sadd.s32 1, %s34
      %s48 = scalar_select %p45, %s47, %s34
      %p49 = scmp.ge.s32.totalorder %s48, 9
      %s50 = scalar_select %p49, 0, %s48
      %s51 = sadd.s32 1, %s33
      %s52 = scalar_select %p49, %s51, %s33
      %p53 = scmp.ge.s32.totalorder %s52, 2
      %s54 = scalar_select %p53, 0, %s52
      %s55 = sadd.s32 1, %s32
      %s56 = scalar_select %p53, %s55, %s32
      %p57 = scmp.ge.s32.totalorder %s56, 1
      %s58 = scalar_select %p57, 0, %s56
      %s59 = sld [smem:[#allocation4 + %s33]]
      %s60 = sld [smem:[#allocation5 + %s33]]
      %s61 = ssub.s32 %s60, 1
      %p62 = scmp.lt.s32.totalorder %s35, %s61
      %s63 = scalar_select %p62, %s35, %s61
      %s64 = sadd.s32 %s59, %s63
      %s65 = sld [smem:[#allocation4 + %s54]]
      %s66 = sld [smem:[#allocation5 + %s54]]
      %s67 = ssub.s32 %s66, 1
      %p68 = scmp.lt.s32.totalorder %s46, %s67
      %s69 = scalar_select %p68, %s46, %s67
      %s70 = sadd.s32 %s65, %s69
      %s71 = ssub.s32 %s32, %s58
      %s72 = ssub.s32 %s64, %s70
      %s73 = sor.u32 %s71, %s72
      %p74 = scmp.eq.s32.totalorder %s73, 0
      %s76 = sadd.s32 %s75, 1
      %s77 = scalar_select %p74, %s75, %s76
      %p80 = pneg %p74
      %p81 = scmp.eq.s32.totalorder %s25, 17
      %p82 = por %p80, %p81
      %p83 = scmp.ne.s32.totalorder %s75, %s78
      %p84 = scmp.eq.s32.totalorder %s25, 0
      %p85 = por %p83, %p84
      %p86 = scmp.ne.s32.totalorder %s75, %s78
      %p87 = scmp.eq.s32.totalorder %s30, 17
      %p88 = por %p86, %p87
      %p89 = scmp.ne.s32.totalorder %s78, %s79
      %p90 = scmp.eq.s32.totalorder %s30, 0
      %p91 = por %p89, %p90
      %p92 = scmp.ne.s32.totalorder %s78, %s79
      %p93 = scmp.eq.s32.totalorder %s31, 17
      %p94 = por %p92, %p93
      %p96 = scmp.ne.s32.totalorder %s79, %s95
      %p97 = scmp.eq.s32.totalorder %s31, 0
      %p98 = por %p96, %p97
      %s99 = sld [smem:[#allocation4 + %s33]]
      %s100 = sld [smem:[#allocation5 + %s33]]
      %s101 = ssub.s32 %s100, 1
      %p102 = scmp.lt.s32.totalorder %s35, %s101
      %s103 = scalar_select %p102, %s35, %s101
      %s104 = sadd.s32 %s99, %s103
      %s105 = sld [smem:[#allocation4 + %s54]]
      %s106 = sld [smem:[#allocation5 + %s54]]
      %s107 = ssub.s32 %s106, 1
      %p108 = scmp.lt.s32.totalorder %s46, %s107
      %s109 = scalar_select %p108, %s46, %s107
      %s110 = sadd.s32 %s105, %s109
      %s111 = ssub.s32 %s34, %s50
      %s112 = ssub.s32 %s104, %s110
      %s113 = sor.u32 %s111, %s112
      %s114 = ssub.s32 %s33, %s54
      %s115 = sor.u32 %s113, %s114
      %p116 = scmp.eq.s32.totalorder %s115, 0
      %s118 = sadd.s32 %s117, 1
      %s119 = scalar_select %p116, %s117, %s118
      %p122 = pneg %p116
      %p123 = scmp.eq.s32.totalorder %s25, 17
      %p124 = por %p122, %p123
      %p125 = scmp.ne.s32.totalorder %s117, %s120
      %p126 = scmp.eq.s32.totalorder %s25, 0
      %p127 = por %p125, %p126
      %p128 = scmp.ne.s32.totalorder %s117, %s120
      %p129 = scmp.eq.s32.totalorder %s30, 17
      %p130 = por %p128, %p129
      %p131 = scmp.ne.s32.totalorder %s120, %s121
      %p132 = scmp.eq.s32.totalorder %s30, 0
      %p133 = por %p131, %p132
      %p134 = scmp.ne.s32.totalorder %s120, %s121
      %p135 = scmp.eq.s32.totalorder %s31, 17
      %p136 = por %p134, %p135
      %p138 = scmp.ne.s32.totalorder %s121, %s137
      %p139 = scmp.eq.s32.totalorder %s31, 0
      %p140 = por %p138, %p139
      %s141 = ssub.s32 %s32, %s58
      %s142 = ssub.s32 %s33, %s54
      %s143 = sor.u32 %s141, %s142
      %p144 = scmp.eq.s32.totalorder %s143, 0
      %s146 = sadd.s32 %s145, 1
      %s147 = scalar_select %p144, %s145, %s146
      %p150 = pneg %p144
      %p151 = scmp.eq.s32.totalorder %s25, 17
      %p152 = por %p150, %p151
      %p153 = scmp.ne.s32.totalorder %s145, %s148
      %p154 = scmp.eq.s32.totalorder %s25, 0
      %p155 = por %p153, %p154
      %p156 = scmp.ne.s32.totalorder %s145, %s148
      %p157 = scmp.eq.s32.totalorder %s30, 17
      %p158 = por %p156, %p157
      %p159 = scmp.ne.s32.totalorder %s148, %s149
      %p160 = scmp.eq.s32.totalorder %s30, 0
      %p161 = por %p159, %p160
      %p162 = scmp.ne.s32.totalorder %s148, %s149
      %p163 = scmp.eq.s32.totalorder %s31, 17
      %p164 = por %p162, %p163
      %p166 = scmp.ne.s32.totalorder %s149, %s165
      %p167 = scmp.eq.s32.totalorder %s31, 0
      %p168 = por %p166, %p167
      %p169 = scmp.le.s32.totalorder 1, %s25
      %p170 = scmp.lt.s32.totalorder %s25, 19
      %p171 = pnand %p169, %p170
      %p172 = pneg %p171
      // Predicated region
      $region9: #{tpu_custom_call.1} parent=5 // pred_check
        _
      $region10: #{tpu_custom_call.1} parent=5 // pred_check_branch
        %174 = sbr.rel (%p171) target = $region12
      $region11: #{tpu_custom_call.1} parent=5 // pred_region
        %s175 = ssub.s32 %s25, 1
      $region12: #{tpu_custom_call.1} parent=5 // pred_fallthru
        _
      %p176 = scmp.lt.s32.totalorder %s25, 18
      // Predicated region
      $region13: #{tpu_custom_call.1} parent=5 // pred_check
        %p177 = pneg %p176
      $region14: #{tpu_custom_call.1} parent=5 // pred_check_branch
        %179 = sbr.rel (%p177) target = $region16
      $region15: #{tpu_custom_call.1} parent=5 // pred_region
        // Predicated region
        $region17: #{tpu_custom_call.1} parent=15 // pred_check
          %p180 = pneg %p85
        $region18: #{tpu_custom_call.1} parent=15 // pred_check_branch
          %182 = sbr.rel (%p180) target = $region20
        $region19: #{tpu_custom_call.1} parent=15 // pred_region
          %s183 = sand.u32 %s75, 1
          %s184 = scalar_lea.sflag [#allocation7], %s183
          %s185 = sand.u32 %s75, 1
          %s186 = smul.addr %s185, 16
          %s187 = scalar_lea.vmem [#allocation6], %s186
          %s188 = sld [smem:[#allocation4 + %s33]]
          %s189 = sld [smem:[#allocation5 + %s33]]
          %s190 = ssub.s32 %s189, 1
          %p191 = scmp.lt.s32.totalorder %s35, %s190
          %s192 = scalar_select %p191, %s35, %s190
          %s193 = sadd.s32 %s188, %s192
          %s194 = smul.u32 2, %s32
          %s195 = smul.u32 2, %s193
          %s197 = ssub.s32 256, 256
          %198 = vsyncadd %s184, %s197
          %s199 = smul.addr %s194, 2
          %s200 = sadd.s32 %s195, %s199
          %s201 = smul.addr %s200, 64
          %s202 = scalar_lea.hbm %s2, %s201
          %s203 = sshll.u32 %s187, 4
          %s204 = int_to_ptr.vmem [resolvable:$true] %s203
          %209 = dma.hbm_to_vmem [thread:$0]  %s202, 256, %s204, %s184, 128, 128, 8
        $region20: #{tpu_custom_call.1} parent=15 // pred_fallthru
          _
        // Predicated region
        $region21: #{tpu_custom_call.1} parent=15 // pred_check
          %p210 = pneg %p127
        $region22: #{tpu_custom_call.1} parent=15 // pred_check_branch
          %212 = sbr.rel (%p210) target = $region24
        $region23: #{tpu_custom_call.1} parent=15 // pred_region
          %s213 = sand.u32 %s117, 1
          %s214 = scalar_lea.sflag [#allocation10], %s213
          %s215 = sand.u32 %s117, 1
          %s216 = smul.addr %s215, 128
          %s217 = scalar_lea.vmem [#allocation9], %s216
          %s218 = sld [smem:[#allocation4 + %s33]]
          %s219 = sld [smem:[#allocation5 + %s33]]
          %s220 = ssub.s32 %s219, 1
          %p221 = scmp.lt.s32.totalorder %s35, %s220
          %s222 = scalar_select %p221, %s35, %s220
          %s223 = sadd.s32 %s218, %s222
          %s224 = smul.u32 32, %s223
          %s226 = ssub.s32 2048, 2048
          %227 = vsyncadd %s214, %s226
          %s228 = smul.addr %s224, 2
          %s229 = sadd.s32 %s33, %s228
          %s230 = smul.addr %s34, 64
          %s231 = sadd.s32 %s229, %s230
          %s232 = smul.addr %s231, 64
          %s233 = scalar_lea.hbm %s3, %s232
          %s234 = sshll.u32 %s217, 4
          %s235 = int_to_ptr.vmem [resolvable:$true] %s234
          %240 = dma.hbm_to_vmem [thread:$0]  %s233, 2048, %s235, %s214, 128, 64, 4
        $region24: #{tpu_custom_call.1} parent=15 // pred_fallthru
          _
      $region16: #{tpu_custom_call.1} parent=5 // pred_fallthru
        _
      %p241 = scmp.le.s32.totalorder 1, %s25
      %p242 = scmp.lt.s32.totalorder %s25, 19
      %p243 = pnand %p241, %p242
      %p244 = pneg %p243
      // Predicated region
      $region25: #{tpu_custom_call.1} parent=5 // pred_check
        _
      $region26: #{tpu_custom_call.1} parent=5 // pred_check_branch
        %246 = sbr.rel (%p243) target = $region28
      $region27: #{tpu_custom_call.1} parent=5 // pred_region
        %s247 = ssub.s32 %s25, 1
        %s248 = sand.u32 %s78, 1
        %s249 = scalar_lea.sflag [#allocation7], %s248
        %s250 = sand.u32 %s78, 1
        %s251 = smul.addr %s250, 16
        %s252 = scalar_lea.vmem [#allocation6], %s251
        // Predicated region
        $region29: #{tpu_custom_call.1} parent=27 // pred_check
          %p253 = pneg %p91
        $region30: #{tpu_custom_call.1} parent=27 // pred_check_branch
          %255 = sbr.rel (%p253) target = $region32
        $region31: #{tpu_custom_call.1} parent=27 // pred_region
          %256 = dma.done %s249, 256
        $region32: #{tpu_custom_call.1} parent=27 // pred_fallthru
          _
        %s257 = sand.u32 %s120, 1
        %s258 = scalar_lea.sflag [#allocation10], %s257
        %s259 = sand.u32 %s120, 1
        %s260 = smul.addr %s259, 128
        %s261 = scalar_lea.vmem [#allocation9], %s260
        // Predicated region
        $region33: #{tpu_custom_call.1} parent=27 // pred_check
          %p262 = pneg %p133
        $region34: #{tpu_custom_call.1} parent=27 // pred_check_branch
          %264 = sbr.rel (%p262) target = $region36
        $region35: #{tpu_custom_call.1} parent=27 // pred_region
          %265 = dma.done %s258, 2048
        $region36: #{tpu_custom_call.1} parent=27 // pred_fallthru
          _
        %s266 = sand.u32 %s78, 1
        %s267 = scalar_lea.sflag [#allocation7], %s266
        %s268 = sand.u32 %s78, 1
        %s269 = smul.addr %s268, 16
        %s270 = scalar_lea.vmem [#allocation6], %s269
        %p271 = pneg %p91
        %p272 = pneg %p88
        %s273 = sand.u32 %s120, 1
        %s274 = scalar_lea.sflag [#allocation10], %s273
        %s275 = sand.u32 %s120, 1
        %s276 = smul.addr %s275, 128
        %s277 = scalar_lea.vmem [#allocation9], %s276
        %p278 = pneg %p133
        %p279 = pneg %p130
        %p280 = pneg %p161
        %p281 = pneg %p158
        %s282 = sand.u32 %s148, 1
        %s283 = scalar_lea.sflag [#allocation8], %s282
        %s284 = sand.u32 %s148, 1
        %s285 = smul.addr %s284, 16
        %s286 = scalar_lea.vmem [#allocation11], %s285
        %s287 = sld [smem:[#allocation4 + %s37]]
        %s288 = sld [smem:[#allocation5 + %s37]]
        %s289 = ssub.s32 %s288, 1
        %p290 = scmp.lt.s32.totalorder %s39, %s289
        %s291 = scalar_select %p290, %s39, %s289
        %s292 = sadd.s32 %s287, %s291
        %s293 = smul.u32 2, %s36
        %s294 = smul.u32 2, %s292
        %s295 = sld [smem:[#allocation4 + %s37]]
        %s296 = sld [smem:[#allocation5 + %s37]]
        %s297 = ssub.s32 %s296, 1
        %p298 = scmp.lt.s32.totalorder %s39, %s297
        %s299 = scalar_select %p298, %s39, %s297
        %s300 = sadd.s32 %s295, %s299
        %s301 = smul.u32 32, %s300
        %s302 = smul.u32 2, %s36
        %s304 = sld [smem:[#allocation5 + %s37]]
        %p305 = scmp.lt.s32.totalorder %s39, %s304
        // Predicated region
        $region37: #{tpu_custom_call.1} parent=27 // pred_check
          %p306 = pneg %p305
        $region38: #{tpu_custom_call.1} parent=27 // pred_check_branch
          %308 = sbr.rel (%p306) target = $region40
        $region39: #{tpu_custom_call.1} parent=27 // pred_region
          %v309 = vld [vmem:[%s252] sm:$0xff]
          %v310 = vld [vmem:[%s252 + $0x8] sm:$0xff]
          %v311 = vld [vmem:[%s261] sm:$0xf]
          %v312 = vld [vmem:[%s261 + $0x4] sm:$0xf]
          %v313 = vld [vmem:[%s261 + $0x8] sm:$0xf]
          %v314 = vld [vmem:[%s261 + $0xc] sm:$0xf]
          %v315 = vld [vmem:[%s261 + $0x10] sm:$0xf]
          %v316 = vld [vmem:[%s261 + $0x14] sm:$0xf]
          %v317 = vld [vmem:[%s261 + $0x18] sm:$0xf]
          %v318 = vld [vmem:[%s261 + $0x1c] sm:$0xf]
          %v319 = vld [vmem:[%s261 + $0x20] sm:$0xf]
          %v320 = vld [vmem:[%s261 + $0x24] sm:$0xf]
          %v321 = vld [vmem:[%s261 + $0x28] sm:$0xf]
          %v322 = vld [vmem:[%s261 + $0x2c] sm:$0xf]
          %v323 = vld [vmem:[%s261 + $0x30] sm:$0xf]
          %v324 = vld [vmem:[%s261 + $0x34] sm:$0xf]
          %v325 = vld [vmem:[%s261 + $0x38] sm:$0xf]
          %v326 = vld [vmem:[%s261 + $0x3c] sm:$0xf]
          %v327 = vld [vmem:[%s261 + $0x40] sm:$0xf]
          %v328 = vld [vmem:[%s261 + $0x44] sm:$0xf]
          %v329 = vld [vmem:[%s261 + $0x48] sm:$0xf]
          %v330 = vld [vmem:[%s261 + $0x4c] sm:$0xf]
          %v331 = vld [vmem:[%s261 + $0x50] sm:$0xf]
          %v332 = vld [vmem:[%s261 + $0x54] sm:$0xf]
          %v333 = vld [vmem:[%s261 + $0x58] sm:$0xf]
          %v334 = vld [vmem:[%s261 + $0x5c] sm:$0xf]
          %v335 = vld [vmem:[%s261 + $0x60] sm:$0xf]
          %v336 = vld [vmem:[%s261 + $0x64] sm:$0xf]
          %v337 = vld [vmem:[%s261 + $0x68] sm:$0xf]
          %v338 = vld [vmem:[%s261 + $0x6c] sm:$0xf]
          %v339 = vld [vmem:[%s261 + $0x70] sm:$0xf]
          %v340 = vld [vmem:[%s261 + $0x74] sm:$0xf]
          %v341 = vld [vmem:[%s261 + $0x78] sm:$0xf]
          %v342 = vld [vmem:[%s261 + $0x7c] sm:$0xf]
          %v345 = vunpack.c.l.b16 %v309
          %v346 = vunpack.c.h.b16 %v309
          %v347 = vunpack.c.l.b16 %v310
          %v348 = vunpack.c.h.b16 %v310
          %v349 = vpack.c.b16 %v347, %v345
          %v350 = vpack.c.b16 %v348, %v346
          %v385 = vunpack.c.l.b16 %v311
          %v386 = vunpack.c.l.b16 %v312
          %v387 = vunpack.c.l.b16 %v313
          %v388 = vunpack.c.l.b16 %v314
          %v389 = vunpack.c.l.b16 %v315
          %v390 = vunpack.c.l.b16 %v316
          %v391 = vunpack.c.l.b16 %v317
          %v392 = vunpack.c.l.b16 %v318
          %v393 = vunpack.c.l.b16 %v319
          %v394 = vunpack.c.l.b16 %v320
          %v395 = vunpack.c.l.b16 %v321
          %v396 = vunpack.c.l.b16 %v322
          %v397 = vunpack.c.l.b16 %v323
          %v398 = vunpack.c.l.b16 %v324
          %v399 = vunpack.c.l.b16 %v325
          %v400 = vunpack.c.l.b16 %v326
          %v401 = vunpack.c.l.b16 %v327
          %v402 = vunpack.c.l.b16 %v328
          %v403 = vunpack.c.l.b16 %v329
          %v404 = vunpack.c.l.b16 %v330
          %v405 = vunpack.c.l.b16 %v331
          %v406 = vunpack.c.l.b16 %v332
          %v407 = vunpack.c.l.b16 %v333
          %v408 = vunpack.c.l.b16 %v334
          %v409 = vunpack.c.l.b16 %v335
          %v410 = vunpack.c.l.b16 %v336
          %v411 = vunpack.c.l.b16 %v337
          %v412 = vunpack.c.l.b16 %v338
          %v413 = vunpack.c.l.b16 %v339
          %v414 = vunpack.c.l.b16 %v340
          %v415 = vunpack.c.l.b16 %v341
          %v416 = vunpack.c.l.b16 %v342
          %v417 = vpack.c.b16 %v386, %v385
          %v418 = vpack.c.b16 %v388, %v387
          %v419 = vpack.c.b16 %v390, %v389
          %v420 = vpack.c.b16 %v392, %v391
          %v421 = vpack.c.b16 %v394, %v393
          %v422 = vpack.c.b16 %v396, %v395
          %v423 = vpack.c.b16 %v398, %v397
          %v424 = vpack.c.b16 %v400, %v399
          %v425 = vpack.c.b16 %v402, %v401
          %v426 = vpack.c.b16 %v404, %v403
          %v427 = vpack.c.b16 %v406, %v405
          %v428 = vpack.c.b16 %v408, %v407
          %v429 = vpack.c.b16 %v410, %v409
          %v430 = vpack.c.b16 %v412, %v411
          %v431 = vpack.c.b16 %v414, %v413
          %v432 = vpack.c.b16 %v416, %v415
          %449 = vmatprep.subr.bf16.mxu0 0
          %450 = vmatpush1.bf16.msra.mxu0 %v424
          %451 = vmatprep.subr.bf16.mxu0 0
          %452 = vmatpush1.bf16.msra.mxu0 %v423
          %453 = vmatprep.subr.bf16.mxu0 0
          %454 = vmatpush1.bf16.msra.mxu0 %v422
          %455 = vmatprep.subr.bf16.mxu0 0
          %456 = vmatpush1.bf16.msra.mxu0 %v421
          %457 = vmatprep.subr.bf16.mxu0 0
          %458 = vmatpush1.bf16.msra.mxu0 %v420
          %459 = vmatprep.subr.bf16.mxu0 0
          %460 = vmatpush1.bf16.msra.mxu0 %v419
          %461 = vmatprep.subr.bf16.mxu0 0
          %462 = vmatpush1.bf16.msra.mxu0 %v418
          %463 = vmatprep.subr.bf16.mxu0 0
          %464 = vmatpush1.bf16.msra.mxu0 %v417
          %465 = vmatprep.subr.bf16.mxu0 0
          %466 = vmatpush2.bf16.msra.mxu0 %v432
          %467 = vmatprep.subr.bf16.mxu0 0
          %468 = vmatpush2.bf16.msra.mxu0 %v431
          %469 = vmatprep.subr.bf16.mxu0 0
          %470 = vmatpush2.bf16.msra.mxu0 %v430
          %471 = vmatprep.subr.bf16.mxu0 0
          %472 = vmatpush2.bf16.msra.mxu0 %v429
          %473 = vmatprep.subr.bf16.mxu0 0
          %474 = vmatpush2.bf16.msra.mxu0 %v428
          %475 = vmatprep.subr.bf16.mxu0 0
          %476 = vmatpush2.bf16.msra.mxu0 %v427
          %477 = vmatprep.subr.bf16.mxu0 0
          %478 = vmatpush2.bf16.msra.mxu0 %v426
          %479 = vmatprep.subr.bf16.mxu0 0
          %480 = vmatpush2.bf16.msra.mxu0 %v425
          %481 = vmatprep.mubr.bf16.mxu0 %v350
          %482 = vmatmul.mubr.bf16.gmra.mxu0 %v349
          %v483 = vpop.f32.mrf.mxu0
          %v484 = vadd.f32 0.0, %v483
          %v485 = vpop.f32.mrf.mxu0
          %v486 = vpop.f32.mrf.mxu0
          %v487 = vadd.f32 0.0, %v486
          %v488 = vpop.f32.mrf.mxu0
          %489 = vdwg.mxu0
          %s490 = ssub.s32 %s304, 1
          %p491 = scmp.eq.s32.totalorder %s39, %s490
          %p492 = scmp.eq.s32.totalorder %s39, 0
          // Predicated region
          $region41: #{tpu_custom_call.1} parent=39 // pred_check
            %p493 = pneg %p492
          $region42: #{tpu_custom_call.1} parent=39 // pred_check_branch
            %495 = sbr.rel (%p493) target = $region44
          $region43: #{tpu_custom_call.1} parent=39 // pred_region
            %p496 = scmp.eq.s32.totalorder %s38, 0
            %p497 = pnand %p491, %p496
            %p498 = pneg %p497
            // Predicated region
            $region45: #{tpu_custom_call.1} parent=43 // pred_check
              _
            $region46: #{tpu_custom_call.1} parent=43 // pred_check_branch
              %500 = sbr.rel (%p497) target = $region48
            $region47: #{tpu_custom_call.1} parent=43 // pred_region
              %501 = vst [vmem:[%s286] sm:$0xff] %v484
              %502 = vst [vmem:[%s286 + $0x8] sm:$0xff] %v487
            $region48: #{tpu_custom_call.1} parent=43 // pred_fallthru
              _
            %p503 = scmp.gt.s32.totalorder %s38, 0
            %p504 = pnand %p491, %p503
            %p505 = pneg %p504
            // Predicated region
            $region49: #{tpu_custom_call.1} parent=43 // pred_check
              _
            $region50: #{tpu_custom_call.1} parent=43 // pred_check_branch
              %507 = sbr.rel (%p504) target = $region52
            $region51: #{tpu_custom_call.1} parent=43 // pred_region
              %v508 = vld [vmem:[%s286] sm:$0xff]
              %v509 = vld [vmem:[%s286 + $0x8] sm:$0xff]
              %v510 = vmax.f32 %v508, %v484
              %v511 = vmax.f32 %v509, %v487
              %512 = vst [vmem:[%s286] sm:$0xff] %v510
              %513 = vst [vmem:[%s286 + $0x8] sm:$0xff] %v511
            $region52: #{tpu_custom_call.1} parent=43 // pred_fallthru
              _
            %p514 = scmp.ne.s32.totalorder %s39, %s490
            // Predicated region
            $region53: #{tpu_custom_call.1} parent=43 // pred_check
              %p515 = pneg %p514
            $region54: #{tpu_custom_call.1} parent=43 // pred_check_branch
              %517 = sbr.rel (%p515) target = $region56
            $region55: #{tpu_custom_call.1} parent=43 // pred_region
              %518 = vst [vmem:[#allocation2] sm:$0xff] %v484
              %519 = vst [vmem:[#allocation2 + $0x8] sm:$0xff] %v487
            $region56: #{tpu_custom_call.1} parent=43 // pred_fallthru
              _
          $region44: #{tpu_custom_call.1} parent=39 // pred_fallthru
            _
          %p520 = scmp.gt.s32.totalorder %s39, 0
          // Predicated region
          $region57: #{tpu_custom_call.1} parent=39 // pred_check
            %p521 = pneg %p520
          $region58: #{tpu_custom_call.1} parent=39 // pred_check_branch
            %523 = sbr.rel (%p521) target = $region60
          $region59: #{tpu_custom_call.1} parent=39 // pred_region
            %v524 = vld [vmem:[#allocation2] sm:$0xff]
            %v525 = vld [vmem:[#allocation2 + $0x8] sm:$0xff]
            %v526 = vadd.f32 %v524, %v484
            %v527 = vadd.f32 %v525, %v487
            %p528 = scmp.eq.s32.totalorder %s38, 0
            %p529 = pnand %p491, %p528
            %p530 = pneg %p529
            // Predicated region
            $region61: #{tpu_custom_call.1} parent=59 // pred_check
              _
            $region62: #{tpu_custom_call.1} parent=59 // pred_check_branch
              %532 = sbr.rel (%p529) target = $region64
            $region63: #{tpu_custom_call.1} parent=59 // pred_region
              %533 = vst [vmem:[%s286] sm:$0xff] %v526
              %534 = vst [vmem:[%s286 + $0x8] sm:$0xff] %v527
            $region64: #{tpu_custom_call.1} parent=59 // pred_fallthru
              _
            %p535 = scmp.gt.s32.totalorder %s38, 0
            %p536 = pnand %p491, %p535
            %p537 = pneg %p536
            // Predicated region
            $region65: #{tpu_custom_call.1} parent=59 // pred_check
              _
            $region66: #{tpu_custom_call.1} parent=59 // pred_check_branch
              %539 = sbr.rel (%p536) target = $region68
            $region67: #{tpu_custom_call.1} parent=59 // pred_region
              %v540 = vld [vmem:[%s286] sm:$0xff]
              %v541 = vld [vmem:[%s286 + $0x8] sm:$0xff]
              %v542 = vmax.f32 %v540, %v526
              %v543 = vmax.f32 %v541, %v527
              %544 = vst [vmem:[%s286] sm:$0xff] %v542
              %545 = vst [vmem:[%s286 + $0x8] sm:$0xff] %v543
            $region68: #{tpu_custom_call.1} parent=59 // pred_fallthru
              _
            %p546 = scmp.ne.s32.totalorder %s39, %s490
            // Predicated region
            $region69: #{tpu_custom_call.1} parent=59 // pred_check
              %p547 = pneg %p546
            $region70: #{tpu_custom_call.1} parent=59 // pred_check_branch
              %549 = sbr.rel (%p547) target = $region72
            $region71: #{tpu_custom_call.1} parent=59 // pred_region
              %550 = vst [vmem:[#allocation2] sm:$0xff] %v526
              %551 = vst [vmem:[#allocation2 + $0x8] sm:$0xff] %v527
            $region72: #{tpu_custom_call.1} parent=59 // pred_fallthru
              _
          $region60: #{tpu_custom_call.1} parent=39 // pred_fallthru
            _
        $region40: #{tpu_custom_call.1} parent=27 // pred_fallthru
          _
        %s552 = sand.u32 %s148, 1
        %s553 = scalar_lea.sflag [#allocation8], %s552
        %s554 = sand.u32 %s148, 1
        %s555 = smul.addr %s554, 16
        %s556 = scalar_lea.vmem [#allocation11], %s555
        // Predicated region
        $region73: #{tpu_custom_call.1} parent=27 // pred_check
          %p557 = pneg %p158
        $region74: #{tpu_custom_call.1} parent=27 // pred_check_branch
          %559 = sbr.rel (%p557) target = $region76
        $region75: #{tpu_custom_call.1} parent=27 // pred_region
          %s560 = smul.u32 2, %s36
          %s562 = ssub.s32 256, 256
          %563 = vsyncadd %s553, %s562
          %s564 = smul.addr %s560, 2
          %s565 = sadd.s32 %s37, %s564
          %s566 = smul.addr %s565, 128
          %s567 = scalar_lea.hbm %s4, %s566
          %s568 = sshll.u32 %s556, 4
          %s569 = int_to_ptr.vmem [resolvable:$true] %s568
          %574 = dma.vmem_to_hbm [thread:$0]  %s569, 256, %s567, %s553, 128, 256, 8
        $region76: #{tpu_custom_call.1} parent=27 // pred_fallthru
          _
      $region28: #{tpu_custom_call.1} parent=5 // pred_fallthru
        _
      %p575 = scmp.le.s32.totalorder 2, %s25
      // Predicated region
      $region77: #{tpu_custom_call.1} parent=5 // pred_check
        %p576 = pneg %p575
      $region78: #{tpu_custom_call.1} parent=5 // pred_check_branch
        %578 = sbr.rel (%p576) target = $region80
      $region79: #{tpu_custom_call.1} parent=5 // pred_region
        %s579 = ssub.s32 %s25, 2
        // Predicated region
        $region81: #{tpu_custom_call.1} parent=79 // pred_check
          %p580 = pneg %p164
        $region82: #{tpu_custom_call.1} parent=79 // pred_check_branch
          %582 = sbr.rel (%p580) target = $region84
        $region83: #{tpu_custom_call.1} parent=79 // pred_region
          %s583 = sand.u32 %s149, 1
          %s584 = scalar_lea.sflag [#allocation8], %s583
          %s585 = sand.u32 %s149, 1
          %s586 = smul.addr %s585, 16
          %s587 = scalar_lea.vmem [#allocation11], %s586
          %588 = dma.done %s584, 256
        $region84: #{tpu_custom_call.1} parent=79 // pred_fallthru
          _
      $region80: #{tpu_custom_call.1} parent=5 // pred_fallthru
        _
    $region6: #{tpu_custom_call.1} parent=1 // loop_footer
      %s29 = sadd.s32 1, %s25
    $region7: #{tpu_custom_call.1} parent=1 // loop_footer_branch
      %24 = sbr.rel target = $region3
    $region8: #{tpu_custom_call.1} parent=1 // loop_exit
      _
    %589 = vsyncpa [#allocation7], 1
    %s590 = scalar_lea.sflag [#allocation7], 1
    %591 = vsyncpa %s590, 1
    %592 = vsyncpa [#allocation10], 1
    %s593 = scalar_lea.sflag [#allocation10], 1
    %594 = vsyncpa %s593, 1
    %595 = vsyncpa [#allocation8], 1
    %s596 = scalar_lea.sflag [#allocation8], 1
    %597 = vsyncpa %s596, 1

</llo_original>
